<compile_context>
chip_gen: v7x
topology: tpu7x:2x2x1
jax: 0.10.0
libtpu: 0.0.40
codegen_flags: <defaults>
</compile_context>

<pallas_src>
import jax
import jax.numpy as jnp
from jax.experimental import pallas as pl
from jax.experimental.pallas import tpu as pltpu

LANE = 128


def _round_up(x, m):
    return (x + m - 1) // m * m


def _cdiv(a, b):
    return -(-a // b)


# ----------------------------------------------------------------------------
# Kernel
# ----------------------------------------------------------------------------
def world_model_kernel(
    state_ref,    # (TILE_B, S)   f32
    action_ref,   # (TILE_B, A)   f32
    w1s_ref,      # (S, HP)       bf16  layer-1 weight, state slice
    w1a_ref,      # (A, HP)       bf16  layer-1 weight, action slice
    b1_ref,       # (1, HP)       f32
    w2_ref,       # (HP, HP)      bf16
    b2_ref,       # (1, HP)       f32
    ws_ref,       # (HP, S)       bf16  state head weight
    bs_ref,       # (1, S)        f32
    wr_ref,       # (HP, R)       bf16  reward head weight
    br_ref,       # (1, R)        f32
    state_out_ref,   # (TILE_B, S) f32
    reward_out_ref,  # (TILE_B, R) f32
):
    # Cast activations to bf16 in-kernel (rides idle VALU slots; avoids a
    # separate XLA cast pass over HBM in the wrapper).
    s = state_ref[...].astype(jnp.bfloat16)
    a = action_ref[...].astype(jnp.bfloat16)

    # ---- layer 1: Linear + ReLU (split matmul replaces the torch.cat) ----
    h1 = jnp.dot(s, w1s_ref[...], preferred_element_type=jnp.float32)
    h1 = h1 + jnp.dot(a, w1a_ref[...], preferred_element_type=jnp.float32)
    h1 = jnp.maximum(h1 + b1_ref[...], 0.0)

    # ---- layer 2: Linear + ReLU ----
    h2 = jnp.dot(h1.astype(jnp.bfloat16), w2_ref[...],
                 preferred_element_type=jnp.float32)
    h2 = jnp.maximum(h2 + b2_ref[...], 0.0)
    h2b = h2.astype(jnp.bfloat16)

    # ---- state head: plain linear, true-width f32 output ----
    state_out_ref[...] = (
        jnp.dot(h2b, ws_ref[...], preferred_element_type=jnp.float32)
        + bs_ref[...]
    )

    # ---- reward head: linear + numerically-stable softmax (exact divide) ----
    r_logits = (
        jnp.dot(h2b, wr_ref[...], preferred_element_type=jnp.float32)
        + br_ref[...]
    )
    r_max = jnp.max(r_logits, axis=-1, keepdims=True)
    e = jnp.exp(r_logits - r_max)
    reward_out_ref[...] = e / jnp.sum(e, axis=-1, keepdims=True)


# ----------------------------------------------------------------------------
# Parameter construction / packing
# ----------------------------------------------------------------------------
def init_params(key, state_dim, action_dim, reward_dim, hidden_dim):
    """Deterministic synthetic init; Linear weights stored (in, out) so the
    kernel computes y = x @ W + b (equivalent to PyTorch x @ W.T)."""
    d_in = state_dim + action_dim
    ks = jax.random.split(key, 8)

    def linear(kw, kb, fan_in, fan_out):
        bound = 1.0 / jnp.sqrt(fan_in)
        w = jax.random.uniform(kw, (fan_in, fan_out), jnp.float32, -bound, bound)
        b = jax.random.uniform(kb, (1, fan_out), jnp.float32, -bound, bound)
        return w, b

    w1, b1 = linear(ks[0], ks[1], d_in, hidden_dim)
    w2, b2 = linear(ks[2], ks[3], hidden_dim, hidden_dim)
    ws, bs = linear(ks[4], ks[5], hidden_dim, state_dim)
    wr, br = linear(ks[6], ks[7], hidden_dim, reward_dim)
    return (w1, b1, w2, b2, ws, bs, wr, br)


def pack_params(params, state_dim, action_dim, reward_dim, hidden_dim):
    """Zero-pad the hidden dim to a multiple of 128 lanes, split W1 into
    state/action slices (removes the concat), and cast matmul weights to bf16
    (biases stay f32). Head weights keep their true output widths; last-dim
    blocks equal the full array so they are legal BlockSpec tiles."""
    w1, b1, w2, b2, ws, bs, wr, br = params
    HP = _round_up(hidden_dim, LANE)

    def pad(a, shape):
        out = jnp.zeros(shape, a.dtype)
        return out.at[tuple(slice(0, s) for s in a.shape)].set(a)

    w1p = pad(w1, (state_dim + action_dim, HP))
    bf16 = lambda a: a.astype(jnp.bfloat16)
    return dict(
        w1s=bf16(w1p[:state_dim]),
        w1a=bf16(w1p[state_dim:]),
        b1=pad(b1, (1, HP)),
        w2=bf16(pad(w2, (HP, HP))),
        b2=pad(b2, (1, HP)),
        ws=bf16(pad(ws, (HP, state_dim))),
        bs=bs,
        wr=bf16(pad(wr, (HP, reward_dim))),
        br=br,
        state_dim=state_dim, action_dim=action_dim,
        reward_dim=reward_dim, hidden_pad=HP,
    )


# ----------------------------------------------------------------------------
# Wrapper
# ----------------------------------------------------------------------------
def _choose_tiling(batch, tile_b_max):
    """Pick (tile_b, padded_batch, n_tiles) so that tiles stay sublane-aligned,
    there are >=2 grid steps when there is enough work (v7x megacore), and the
    last-tile zero padding is <8 rows per tile."""
    b8 = _round_up(max(batch, 8), 8)
    n_tiles = _cdiv(b8, tile_b_max)
    if b8 >= 16:
        n_tiles = max(n_tiles, 2)
    tile_b = _round_up(_cdiv(b8, n_tiles), 8)
    return tile_b, n_tiles * tile_b, n_tiles


def world_model_forward(state, action, packed, *, tile_b=1024):
    """Fused WorldModel forward. Returns (state_pred, reward_pred)."""
    S = packed["state_dim"]
    A = packed["action_dim"]
    R = packed["reward_dim"]

    B = state.shape[0]
    tile_b, Bp, n_tiles = _choose_tiling(B, tile_b)
    if Bp != B:
        state = jnp.pad(state, ((0, Bp - B), (0, 0)))
        action = jnp.pad(action, ((0, Bp - B), (0, 0)))

    weights = [packed[k] for k in ("w1s", "w1a", "b1", "w2", "b2",
                                   "ws", "bs", "wr", "br")]

    # VMEM budget: double-buffered f32 activation/output tiles + (default
    # double-buffered) resident weights + headroom; clamp well under v7x's
    # 64 MiB per-TC physical VMEM.
    bytes_act = 2 * tile_b * (S + A) * 4
    bytes_out = 2 * tile_b * (S + R) * 4
    bytes_w = 2 * sum(int(w.size) * w.dtype.itemsize for w in weights)
    vmem_limit = int(min(max(bytes_act + bytes_out + bytes_w + (4 << 20),
                             32 << 20), 48 << 20))

    act_spec = lambda d: pl.BlockSpec((tile_b, d), lambda i: (i, 0))
    resident = lambda a: pl.BlockSpec(a.shape, lambda i: (0, 0))  # stays in VMEM

    state_out, reward_out = pl.pallas_call(
        world_model_kernel,
        out_shape=(jax.ShapeDtypeStruct((Bp, S), jnp.float32),
                   jax.ShapeDtypeStruct((Bp, R), jnp.float32)),
        grid=(n_tiles,),
        in_specs=[act_spec(S), act_spec(A)] + [resident(w) for w in weights],
        out_specs=(pl.BlockSpec((tile_b, S), lambda i: (i, 0)),
                   pl.BlockSpec((tile_b, R), lambda i: (i, 0))),
        compiler_params=pltpu.CompilerParams(
            dimension_semantics=("parallel",),   # megacore sharding on v7x
            vmem_limit_bytes=vmem_limit,
        ),
    )(state, action, *weights)

    if Bp != B:
        state_out = state_out[:B]
        reward_out = reward_out[:B]
    return state_out, reward_out


# ----------------------------------------------------------------------------
# Demo / correctness check
# ----------------------------------------------------------------------------
if __name__ == "__main__":
    B = 8
    STATE_DIM = 16
    ACTION_DIM = 8
    REWARD_DIM = 8
    HIDDEN_DIM = 32

    key = jax.random.PRNGKey(0)
    k_state, k_action, k_params = jax.random.split(key, 3)

    state = jax.random.normal(k_state, (B, STATE_DIM), jnp.float32)
    action = jax.random.normal(k_action, (B, ACTION_DIM), jnp.float32)
    params = init_params(k_params, STATE_DIM, ACTION_DIM, REWARD_DIM, HIDDEN_DIM)
    packed = pack_params(params, STATE_DIM, ACTION_DIM, REWARD_DIM, HIDDEN_DIM)

    state_pred, reward_pred = world_model_forward(state, action, packed)
    jax.block_until_ready((state_pred, reward_pred))

    # Pure-JAX f32 reference (mirrors the PyTorch module).
    w1, b1, w2, b2, ws, bs, wr, br = params
    x = jnp.concatenate([state, action], axis=-1)
    h = jnp.maximum(x @ w1 + b1, 0.0)
    h = jnp.maximum(h @ w2 + b2, 0.0)
    sp_ref = h @ ws + bs
    rp_ref = jax.nn.softmax(h @ wr + br, axis=-1)

    assert state_pred.shape == (B, STATE_DIM)
    assert reward_pred.shape == (B, REWARD_DIM)
    # bf16 matmuls -> looser tolerance than pure f32
    assert jnp.allclose(state_pred, sp_ref, atol=5e-2, rtol=5e-2), \
        float(jnp.max(jnp.abs(state_pred - sp_ref)))
    assert jnp.allclose(reward_pred, rp_ref, atol=5e-2, rtol=5e-2), \
        float(jnp.max(jnp.abs(reward_pred - rp_ref)))
    # exact divide in the softmax -> probabilities sum to 1 to f32 precision
    assert jnp.allclose(jnp.sum(reward_pred, axis=-1), 1.0, atol=1e-5)

    print("KERNEL_OK")
</pallas_src>

<mosaic_0001>
module attributes {stable_mosaic.version = 11 : i64} {
  func.func @world_model_kernel(%arg0: i32, %arg1: memref<8x16xf32, #tpu.memory_space<vmem>>, %arg2: memref<8x8xf32, #tpu.memory_space<vmem>>, %arg3: memref<16x128xbf16, #tpu.memory_space<vmem>>, %arg4: memref<8x128xbf16, #tpu.memory_space<vmem>>, %arg5: memref<1x128xf32, #tpu.memory_space<vmem>>, %arg6: memref<128x128xbf16, #tpu.memory_space<vmem>>, %arg7: memref<1x128xf32, #tpu.memory_space<vmem>>, %arg8: memref<128x16xbf16, #tpu.memory_space<vmem>>, %arg9: memref<1x16xf32, #tpu.memory_space<vmem>>, %arg10: memref<128x8xbf16, #tpu.memory_space<vmem>>, %arg11: memref<1x8xf32, #tpu.memory_space<vmem>>, %arg12: memref<8x16xf32, #tpu.memory_space<vmem>>, %arg13: memref<8x8xf32, #tpu.memory_space<vmem>>) attributes {dimension_semantics = [#tpu.dimension_semantics<parallel>], iteration_bounds = array<i64: 1>, scalar_prefetch = 0 : i64, scratch_operands = 0 : i64, tpu.core_type = #tpu.core_type<tc>, window_params = [{transform_indices = @transform_0, window_bounds = array<i64: 8, 16>}, {transform_indices = @transform_1, window_bounds = array<i64: 8, 8>}, {pipeline_mode = #tpu.pipeline_mode<synchronous>, transform_indices = @transform_2, window_bounds = array<i64: 16, 128>}, {pipeline_mode = #tpu.pipeline_mode<synchronous>, transform_indices = @transform_3, window_bounds = array<i64: 8, 128>}, {pipeline_mode = #tpu.pipeline_mode<synchronous>, transform_indices = @transform_4, window_bounds = array<i64: 1, 128>}, {pipeline_mode = #tpu.pipeline_mode<synchronous>, transform_indices = @transform_5, window_bounds = array<i64: 128, 128>}, {pipeline_mode = #tpu.pipeline_mode<synchronous>, transform_indices = @transform_6, window_bounds = array<i64: 1, 128>}, {pipeline_mode = #tpu.pipeline_mode<synchronous>, transform_indices = @transform_7, window_bounds = array<i64: 128, 16>}, {pipeline_mode = #tpu.pipeline_mode<synchronous>, transform_indices = @transform_8, window_bounds = array<i64: 1, 16>}, {pipeline_mode = #tpu.pipeline_mode<synchronous>, transform_indices = @transform_9, window_bounds = array<i64: 128, 8>}, {pipeline_mode = #tpu.pipeline_mode<synchronous>, transform_indices = @transform_10, window_bounds = array<i64: 1, 8>}, {transform_indices = @transform_11, window_bounds = array<i64: 8, 16>}, {transform_indices = @transform_12, window_bounds = array<i64: 8, 8>}]} {
    %c0 = arith.constant 0 : index
    %c0_0 = arith.constant 0 : index
    %0 = vector.load %arg1[%c0, %c0_0] : memref<8x16xf32, #tpu.memory_space<vmem>>, vector<8x16xf32>
    %1 = arith.truncf %0 : vector<8x16xf32> to vector<8x16xbf16>
    %c0_1 = arith.constant 0 : index
    %c0_2 = arith.constant 0 : index
    %2 = vector.load %arg2[%c0_1, %c0_2] : memref<8x8xf32, #tpu.memory_space<vmem>>, vector<8x8xf32>
    %3 = arith.truncf %2 : vector<8x8xf32> to vector<8x8xbf16>
    %c0_3 = arith.constant 0 : index
    %c0_4 = arith.constant 0 : index
    %4 = vector.load %arg3[%c0_3, %c0_4] : memref<16x128xbf16, #tpu.memory_space<vmem>>, vector<16x128xbf16>
    %cst = arith.constant dense<0.000000e+00> : vector<8x128xf32>
    %5 = tpu.matmul %1, %4, %cst {dimension_numbers = #tpu.dot_dimension_numbers<[1], [0], [0], [1], [0, 0, 1, 1], [], []>} : vector<8x16xbf16>, vector<16x128xbf16>, vector<8x128xf32> -> vector<8x128xf32>
    %c0_5 = arith.constant 0 : index
    %c0_6 = arith.constant 0 : index
    %6 = vector.load %arg4[%c0_5, %c0_6] : memref<8x128xbf16, #tpu.memory_space<vmem>>, vector<8x128xbf16>
    %cst_7 = arith.constant dense<0.000000e+00> : vector<8x128xf32>
    %7 = tpu.matmul %3, %6, %cst_7 {dimension_numbers = #tpu.dot_dimension_numbers<[1], [0], [0], [1], [0, 0, 1, 1], [], []>} : vector<8x8xbf16>, vector<8x128xbf16>, vector<8x128xf32> -> vector<8x128xf32>
    %8 = arith.addf %5, %7 : vector<8x128xf32>
    %c0_8 = arith.constant 0 : index
    %c0_9 = arith.constant 0 : index
    %9 = vector.load %arg5[%c0_8, %c0_9] : memref<1x128xf32, #tpu.memory_space<vmem>>, vector<1x128xf32>
    %10 = vector.broadcast %9 : vector<1x128xf32> to vector<8x128xf32>
    %11 = arith.addf %8, %10 : vector<8x128xf32>
    %cst_10 = arith.constant 0.000000e+00 : f32
    %12 = vector.broadcast %cst_10 : f32 to vector<8x128xf32>
    %13 = arith.maximumf %11, %12 : vector<8x128xf32>
    %14 = arith.truncf %13 : vector<8x128xf32> to vector<8x128xbf16>
    %c0_11 = arith.constant 0 : index
    %c0_12 = arith.constant 0 : index
    %15 = vector.load %arg6[%c0_11, %c0_12] : memref<128x128xbf16, #tpu.memory_space<vmem>>, vector<128x128xbf16>
    %cst_13 = arith.constant dense<0.000000e+00> : vector<8x128xf32>
    %16 = tpu.matmul %14, %15, %cst_13 {dimension_numbers = #tpu.dot_dimension_numbers<[1], [0], [0], [1], [0, 0, 1, 1], [], []>} : vector<8x128xbf16>, vector<128x128xbf16>, vector<8x128xf32> -> vector<8x128xf32>
    %c0_14 = arith.constant 0 : index
    %c0_15 = arith.constant 0 : index
    %17 = vector.load %arg7[%c0_14, %c0_15] : memref<1x128xf32, #tpu.memory_space<vmem>>, vector<1x128xf32>
    %18 = vector.broadcast %17 : vector<1x128xf32> to vector<8x128xf32>
    %19 = arith.addf %16, %18 : vector<8x128xf32>
    %cst_16 = arith.constant 0.000000e+00 : f32
    %20 = vector.broadcast %cst_16 : f32 to vector<8x128xf32>
    %21 = arith.maximumf %19, %20 : vector<8x128xf32>
    %22 = arith.truncf %21 : vector<8x128xf32> to vector<8x128xbf16>
    %c0_17 = arith.constant 0 : index
    %c0_18 = arith.constant 0 : index
    %23 = vector.load %arg8[%c0_17, %c0_18] : memref<128x16xbf16, #tpu.memory_space<vmem>>, vector<128x16xbf16>
    %cst_19 = arith.constant dense<0.000000e+00> : vector<8x16xf32>
    %24 = tpu.matmul %22, %23, %cst_19 {dimension_numbers = #tpu.dot_dimension_numbers<[1], [0], [0], [1], [0, 0, 1, 1], [], []>} : vector<8x128xbf16>, vector<128x16xbf16>, vector<8x16xf32> -> vector<8x16xf32>
    %c0_20 = arith.constant 0 : index
    %c0_21 = arith.constant 0 : index
    %25 = vector.load %arg9[%c0_20, %c0_21] : memref<1x16xf32, #tpu.memory_space<vmem>>, vector<1x16xf32>
    %26 = vector.broadcast %25 : vector<1x16xf32> to vector<8x16xf32>
    %27 = arith.addf %24, %26 : vector<8x16xf32>
    %c0_22 = arith.constant 0 : index
    %c0_23 = arith.constant 0 : index
    %28 = vector.load %arg12[%c0_22, %c0_23] : memref<8x16xf32, #tpu.memory_space<vmem>>, vector<8x16xf32>
    tpu.vector_store %arg12[%c0_22, %c0_23], %27 {strides = array<i32>} : memref<8x16xf32, #tpu.memory_space<vmem>>, vector<8x16xf32>,
    %c0_24 = arith.constant 0 : index
    %c0_25 = arith.constant 0 : index
    %29 = vector.load %arg10[%c0_24, %c0_25] : memref<128x8xbf16, #tpu.memory_space<vmem>>, vector<128x8xbf16>
    %cst_26 = arith.constant dense<0.000000e+00> : vector<8x8xf32>
    %30 = tpu.matmul %22, %29, %cst_26 {dimension_numbers = #tpu.dot_dimension_numbers<[1], [0], [0], [1], [0, 0, 1, 1], [], []>} : vector<8x128xbf16>, vector<128x8xbf16>, vector<8x8xf32> -> vector<8x8xf32>
    %c0_27 = arith.constant 0 : index
    %c0_28 = arith.constant 0 : index
    %31 = vector.load %arg11[%c0_27, %c0_28] : memref<1x8xf32, #tpu.memory_space<vmem>>, vector<1x8xf32>
    %32 = vector.broadcast %31 : vector<1x8xf32> to vector<8x8xf32>
    %33 = arith.addf %30, %32 : vector<8x8xf32>
    %cst_29 = arith.constant dense<0xFF800000> : vector<8xf32>
    %34 = vector.multi_reduction <maximumf>, %33, %cst_29 [1] : vector<8x8xf32> to vector<8xf32>
    %35 = vector.shape_cast %34 : vector<8xf32> to vector<8x1xf32>
    %36 = vector.broadcast %35 : vector<8x1xf32> to vector<8x8xf32>
    %37 = arith.subf %33, %36 : vector<8x8xf32>
    %38 = math.exp %37 : vector<8x8xf32>
    %cst_30 = arith.constant dense<0.000000e+00> : vector<8xf32>
    %39 = vector.multi_reduction <add>, %38, %cst_30 [1] : vector<8x8xf32> to vector<8xf32>
    %40 = vector.shape_cast %39 : vector<8xf32> to vector<8x1xf32>
    %41 = vector.broadcast %40 : vector<8x1xf32> to vector<8x8xf32>
    %42 = arith.divf %38, %41 : vector<8x8xf32>
    %c0_31 = arith.constant 0 : index
    %c0_32 = arith.constant 0 : index
    %43 = vector.load %arg13[%c0_31, %c0_32] : memref<8x8xf32, #tpu.memory_space<vmem>>, vector<8x8xf32>
    tpu.vector_store %arg13[%c0_31, %c0_32], %42 {strides = array<i32>} : memref<8x8xf32, #tpu.memory_space<vmem>>, vector<8x8xf32>,
    return
  }
  func.func @transform_0(%arg0: i32) -> (i32, i32) {
    %c0_i32 = arith.constant 0 : i32
    %c0_i32_0 = arith.constant 0 : i32
    return %arg0, %c0_i32 : i32, i32
  }
  func.func @transform_1(%arg0: i32) -> (i32, i32) {
    %c0_i32 = arith.constant 0 : i32
    %c0_i32_0 = arith.constant 0 : i32
    return %arg0, %c0_i32 : i32, i32
  }
  func.func @transform_2(%arg0: i32) -> (i32, i32) {
    %c0_i32 = arith.constant 0 : i32
    %c0_i32_0 = arith.constant 0 : i32
    %c0_i32_1 = arith.constant 0 : i32
    return %c0_i32, %c0_i32_0 : i32, i32
  }
  func.func @transform_3(%arg0: i32) -> (i32, i32) {
    %c0_i32 = arith.constant 0 : i32
    %c0_i32_0 = arith.constant 0 : i32
    %c0_i32_1 = arith.constant 0 : i32
    return %c0_i32, %c0_i32_0 : i32, i32
  }
  func.func @transform_4(%arg0: i32) -> (i32, i32) {
    %c0_i32 = arith.constant 0 : i32
    %c0_i32_0 = arith.constant 0 : i32
    %c0_i32_1 = arith.constant 0 : i32
    return %c0_i32, %c0_i32_0 : i32, i32
  }
  func.func @transform_5(%arg0: i32) -> (i32, i32) {
    %c0_i32 = arith.constant 0 : i32
    %c0_i32_0 = arith.constant 0 : i32
    %c0_i32_1 = arith.constant 0 : i32
    return %c0_i32, %c0_i32_0 : i32, i32
  }
  func.func @transform_6(%arg0: i32) -> (i32, i32) {
    %c0_i32 = arith.constant 0 : i32
    %c0_i32_0 = arith.constant 0 : i32
    %c0_i32_1 = arith.constant 0 : i32
    return %c0_i32, %c0_i32_0 : i32, i32
  }
  func.func @transform_7(%arg0: i32) -> (i32, i32) {
    %c0_i32 = arith.constant 0 : i32
    %c0_i32_0 = arith.constant 0 : i32
    %c0_i32_1 = arith.constant 0 : i32
    return %c0_i32, %c0_i32_0 : i32, i32
  }
  func.func @transform_8(%arg0: i32) -> (i32, i32) {
    %c0_i32 = arith.constant 0 : i32
    %c0_i32_0 = arith.constant 0 : i32
    %c0_i32_1 = arith.constant 0 : i32
    return %c0_i32, %c0_i32_0 : i32, i32
  }
  func.func @transform_9(%arg0: i32) -> (i32, i32) {
    %c0_i32 = arith.constant 0 : i32
    %c0_i32_0 = arith.constant 0 : i32
    %c0_i32_1 = arith.constant 0 : i32
    return %c0_i32, %c0_i32_0 : i32, i32
  }
  func.func @transform_10(%arg0: i32) -> (i32, i32) {
    %c0_i32 = arith.constant 0 : i32
    %c0_i32_0 = arith.constant 0 : i32
    %c0_i32_1 = arith.constant 0 : i32
    return %c0_i32, %c0_i32_0 : i32, i32
  }
  func.func @transform_11(%arg0: i32) -> (i32, i32) {
    %c0_i32 = arith.constant 0 : i32
    %c0_i32_0 = arith.constant 0 : i32
    return %arg0, %c0_i32 : i32, i32
  }
  func.func @transform_12(%arg0: i32) -> (i32, i32) {
    %c0_i32 = arith.constant 0 : i32
    %c0_i32_0 = arith.constant 0 : i32
    return %arg0, %c0_i32 : i32, i32
  }
}

</mosaic_0001>

<llo_original>
// kernel: tpu_custom_call.1
$region0: #{tpu_custom_call.1}
  #allocation0 [shape = 'u32[]', space=smem, size = 0x4, offset = 0x4, fixed_abs, tag = 'smem constant byte address 0x4 - core index']
  #allocation1 [shape = 'u32[144,128]{1,0:T(1,128)}', space=vmem, size = 0x12000, scoped, tag = 'internal scratch']
  %s0 = inlined_call_operand.vmem [shape: f32[8,16], index: 0, kind: input, shape index: {}]
  %s1 = inlined_call_operand.vmem [shape: f32[8,8], index: 1, kind: input, shape index: {}]
  %s2 = inlined_call_operand.vmem [shape: bf16[16,128], index: 2, kind: input, shape index: {}]
  %s3 = inlined_call_operand.vmem [shape: bf16[8,128], index: 3, kind: input, shape index: {}]
  %s4 = inlined_call_operand.vmem [shape: f32[1,128], index: 4, kind: input, shape index: {}]
  %s5 = inlined_call_operand.vmem [shape: bf16[128,128], index: 5, kind: input, shape index: {}]
  %s6 = inlined_call_operand.vmem [shape: f32[1,128], index: 6, kind: input, shape index: {}]
  %s7 = inlined_call_operand.vmem [shape: bf16[128,16], index: 7, kind: input, shape index: {}]
  %s8 = inlined_call_operand.vmem [shape: f32[1,16], index: 8, kind: input, shape index: {}]
  %s9 = inlined_call_operand.vmem [shape: bf16[128,8], index: 9, kind: input, shape index: {}]
  %s10 = inlined_call_operand.vmem [shape: f32[1,8], index: 10, kind: input, shape index: {}]
  %s11 = inlined_call_operand.hbm [shape: f32[8,16], index: 11, kind: output, shape index: {0}]
  %s12 = inlined_call_operand.hbm [shape: f32[8,8], index: 12, kind: output, shape index: {1}]
  %13 = xla_tuple %s11, %s12
  %s14 = sld [smem:[#allocation0]]
  $region62: #{tpu_custom_call.1} parent=0
    _
  %s16 = ssub.s32 1, %s14
  %s17 = scalar_select 0, %s16, %s14
  $region1: #{tpu_custom_call.1} parent=0
    #allocation2 [shape = 'u8[4096]{0}', space=vmem, size = 0x1000, scoped, tag = 'output window, operand 0, single buffered']
    #allocation3 [shape = 's32[1]{0}', space=sflag, size = 0x4, scoped, tag = 'scoped memory for tpu_custom_call.1']
    #allocation4 [shape = 'u8[4096]{0}', space=vmem, size = 0x1000, scoped, tag = 'output window, operand 1, single buffered']
    #allocation5 [shape = 's32[1]{0}', space=sflag, size = 0x4, scoped, tag = 'scoped memory for tpu_custom_call.1']
    %18 = vsyncpa [#allocation3], 0
    %19 = vsyncpa [#allocation5], 0
    // Predicated region
    $region2: #{tpu_custom_call.1} parent=1 // pred_check
      _
    $region3: #{tpu_custom_call.1} parent=1 // pred_check_branch
      %21 = sbr.rel (0) target = $region5
    $region4: #{tpu_custom_call.1} parent=1 // pred_region
      _
    $region5: #{tpu_custom_call.1} parent=1 // pred_fallthru
      _
    // Predicated region
    $region6: #{tpu_custom_call.1} parent=1 // pred_check
      _
    $region7: #{tpu_custom_call.1} parent=1 // pred_check_branch
      %23 = sbr.rel (0) target = $region9
    $region8: #{tpu_custom_call.1} parent=1 // pred_region
      _
    $region9: #{tpu_custom_call.1} parent=1 // pred_fallthru
      _
    // Predicated region
    $region10: #{tpu_custom_call.1} parent=1 // pred_check
      _
    $region11: #{tpu_custom_call.1} parent=1 // pred_check_branch
      %25 = sbr.rel (0) target = $region13
    $region12: #{tpu_custom_call.1} parent=1 // pred_region
      _
    $region13: #{tpu_custom_call.1} parent=1 // pred_fallthru
      _
    // Predicated region
    $region14: #{tpu_custom_call.1} parent=1 // pred_check
      _
    $region15: #{tpu_custom_call.1} parent=1 // pred_check_branch
      %27 = sbr.rel (0) target = $region17
    $region16: #{tpu_custom_call.1} parent=1 // pred_region
      _
    $region17: #{tpu_custom_call.1} parent=1 // pred_fallthru
      _
    // Predicated region
    $region18: #{tpu_custom_call.1} parent=1 // pred_check
      _
    $region19: #{tpu_custom_call.1} parent=1 // pred_check_branch
      %29 = sbr.rel (0) target = $region21
    $region20: #{tpu_custom_call.1} parent=1 // pred_region
      _
    $region21: #{tpu_custom_call.1} parent=1 // pred_fallthru
      _
    // Predicated region
    $region22: #{tpu_custom_call.1} parent=1 // pred_check
      _
    $region23: #{tpu_custom_call.1} parent=1 // pred_check_branch
      %31 = sbr.rel (0) target = $region25
    $region24: #{tpu_custom_call.1} parent=1 // pred_region
      _
    $region25: #{tpu_custom_call.1} parent=1 // pred_fallthru
      _
    // Predicated region
    $region26: #{tpu_custom_call.1} parent=1 // pred_check
      _
    $region27: #{tpu_custom_call.1} parent=1 // pred_check_branch
      %33 = sbr.rel (0) target = $region29
    $region28: #{tpu_custom_call.1} parent=1 // pred_region
      _
    $region29: #{tpu_custom_call.1} parent=1 // pred_fallthru
      _
    // Predicated region
    $region30: #{tpu_custom_call.1} parent=1 // pred_check
      _
    $region31: #{tpu_custom_call.1} parent=1 // pred_check_branch
      %35 = sbr.rel (0) target = $region33
    $region32: #{tpu_custom_call.1} parent=1 // pred_region
      _
    $region33: #{tpu_custom_call.1} parent=1 // pred_fallthru
      _
    // Predicated region
    $region34: #{tpu_custom_call.1} parent=1 // pred_check
      _
    $region35: #{tpu_custom_call.1} parent=1 // pred_check_branch
      %37 = sbr.rel (0) target = $region37
    $region36: #{tpu_custom_call.1} parent=1 // pred_region
      _
    $region37: #{tpu_custom_call.1} parent=1 // pred_fallthru
      _
    // Predicated region
    $region38: #{tpu_custom_call.1} parent=1 // pred_check
      _
    $region39: #{tpu_custom_call.1} parent=1 // pred_check_branch
      %39 = sbr.rel (0) target = $region41
    $region40: #{tpu_custom_call.1} parent=1 // pred_region
      _
    $region41: #{tpu_custom_call.1} parent=1 // pred_fallthru
      _
    // Predicated region
    $region42: #{tpu_custom_call.1} parent=1 // pred_check
      _
    $region43: #{tpu_custom_call.1} parent=1 // pred_check_branch
      %41 = sbr.rel (0) target = $region45
    $region44: #{tpu_custom_call.1} parent=1 // pred_region
      _
    $region45: #{tpu_custom_call.1} parent=1 // pred_fallthru
      _
    %v43 = vld [vmem:[%s0] sm:$0xff]
    %v44 = vpack.c.bf16 %v43, %v43
    %v45 = vld [vmem:[%s1] sm:$0xff]
    %v46 = vpack.c.bf16 %v45, %v45
    %v47 = vld [vmem:[%s2] sm:$0xf]
    %v48 = vld [vmem:[%s2 + $0x4] sm:$0xf]
    %v49 = vld [vmem:[%s3] sm:$0xf]
    %vm50 = vcmask 64512
    %v52 = vsel %vm50, %v46, 0
    %vm54 = vcmask 1043456
    %v56 = vsel %vm54, %v49, 0
    %58 = vmatprep.subr.bf16.mxu0 0
    %59 = vmatpush1.bf16.msra.mxu0 %v56
    %60 = vmatprep.subr.bf16.mxu0 0
    %61 = vmatpush1.bf16.msra.mxu0 0
    %62 = vmatprep.subr.bf16.mxu0 0
    %63 = vmatpush1.bf16.msra.mxu0 0
    %64 = vmatprep.subr.bf16.mxu0 0
    %65 = vmatpush1.bf16.msra.mxu0 0
    %66 = vmatprep.subr.bf16.mxu0 0
    %67 = vmatpush1.bf16.msra.mxu0 0
    %68 = vmatprep.subr.bf16.mxu0 0
    %69 = vmatpush1.bf16.msra.mxu0 0
    %70 = vmatprep.subr.bf16.mxu0 0
    %71 = vmatpush1.bf16.msra.mxu0 0
    %72 = vmatprep.subr.bf16.mxu0 0
    %73 = vmatpush1.bf16.msra.mxu0 0
    %74 = vmatprep.subr.bf16.mxu0 0
    %75 = vmatpush1.bf16.msra.mxu0 0
    %76 = vmatprep.subr.bf16.mxu0 0
    %77 = vmatpush1.bf16.msra.mxu0 0
    %78 = vmatprep.subr.bf16.mxu0 0
    %79 = vmatpush1.bf16.msra.mxu0 0
    %80 = vmatprep.subr.bf16.mxu0 0
    %81 = vmatpush1.bf16.msra.mxu0 0
    %82 = vmatprep.subr.bf16.mxu0 0
    %83 = vmatpush1.bf16.msra.mxu0 0
    %84 = vmatprep.subr.bf16.mxu0 0
    %85 = vmatpush1.bf16.msra.mxu0 0
    %86 = vmatprep.subr.bf16.mxu0 0
    %87 = vmatpush1.bf16.msra.mxu0 0
    %88 = vmatprep.subr.bf16.mxu0 0
    %89 = vmatpush1.bf16.msra.mxu0 0
    %90 = vmatprep.mubr.bf16.mxu0 0
    %91 = vmatmul.mubr.bf16.gmra.mrb[0].mxu0 %v52
    %v92 = vpop.f32.mrb[0].mxu0
    %v93 = vadd.f32 0.0, %v92
    %v94 = vpop.f32.mrb[0].mxu0
    %v95 = vpop.f32.mrb[0].mxu0
    %v96 = vpop.f32.mrb[0].mxu0
    %97 = vdwg.mxu0
    %v100 = vunpack.c.l.b16 %v47
    %v101 = vunpack.c.l.b16 %v48
    %v102 = vpack.c.b16 %v101, %v100
    %vm104 = vcmask 130048
    %v106 = vsel %vm104, %v44, 0
    %108 = vmatprep.subr.bf16.mxu0 0
    %109 = vmatpush1.bf16.msra.mxu0 %v102
    %110 = vmatprep.subr.bf16.mxu0 0
    %111 = vmatpush1.bf16.msra.mxu0 0
    %112 = vmatprep.subr.bf16.mxu0 0
    %113 = vmatpush1.bf16.msra.mxu0 0
    %114 = vmatprep.subr.bf16.mxu0 0
    %115 = vmatpush1.bf16.msra.mxu0 0
    %116 = vmatprep.subr.bf16.mxu0 0
    %117 = vmatpush1.bf16.msra.mxu0 0
    %118 = vmatprep.subr.bf16.mxu0 0
    %119 = vmatpush1.bf16.msra.mxu0 0
    %120 = vmatprep.subr.bf16.mxu0 0
    %121 = vmatpush1.bf16.msra.mxu0 0
    %122 = vmatprep.subr.bf16.mxu0 0
    %123 = vmatpush1.bf16.msra.mxu0 0
    %124 = vmatprep.subr.bf16.mxu0 0
    %125 = vmatpush1.bf16.msra.mxu0 0
    %126 = vmatprep.subr.bf16.mxu0 0
    %127 = vmatpush1.bf16.msra.mxu0 0
    %128 = vmatprep.subr.bf16.mxu0 0
    %129 = vmatpush1.bf16.msra.mxu0 0
    %130 = vmatprep.subr.bf16.mxu0 0
    %131 = vmatpush1.bf16.msra.mxu0 0
    %132 = vmatprep.subr.bf16.mxu0 0
    %133 = vmatpush1.bf16.msra.mxu0 0
    %134 = vmatprep.subr.bf16.mxu0 0
    %135 = vmatpush1.bf16.msra.mxu0 0
    %136 = vmatprep.subr.bf16.mxu0 0
    %137 = vmatpush1.bf16.msra.mxu0 0
    %138 = vmatprep.subr.bf16.mxu0 0
    %139 = vmatpush1.bf16.msra.mxu0 0
    %140 = vmatprep.mubr.bf16.mxu0 0
    %141 = vmatmul.mubr.bf16.gmra.mrb[0].mxu0 %v106
    %v142 = vpop.f32.mrb[0].mxu0
    %v143 = vadd.f32 %v93, %v142
    %v144 = vpop.f32.mrb[0].mxu0
    %v145 = vpop.f32.mrb[0].mxu0
    %v146 = vpop.f32.mrb[0].mxu0
    %147 = vdwg.mxu0
    %v148 = vld [vmem:[%s4] sm:$0x1]
    %v150 = vlaneseq
    %v151 = vshrl.u32 %v150, 7
    %v152 = vsub.s32 0, %v151
    %v153 = vrot.slane %v148, %v152
    %v155 = vadd.f32 %v143, %v153
    %v156 = vmax.f32 %v155, 0.0
    %v157 = vpack.c.bf16 %v156, %v156
    %v158 = vld [vmem:[%s5] sm:$0xf]
    %v159 = vld [vmem:[%s5 + $0x4] sm:$0xf]
    %v160 = vld [vmem:[%s5 + $0x8] sm:$0xf]
    %v161 = vld [vmem:[%s5 + $0xc] sm:$0xf]
    %v162 = vld [vmem:[%s5 + $0x10] sm:$0xf]
    %v163 = vld [vmem:[%s5 + $0x14] sm:$0xf]
    %v164 = vld [vmem:[%s5 + $0x18] sm:$0xf]
    %v165 = vld [vmem:[%s5 + $0x1c] sm:$0xf]
    %v166 = vld [vmem:[%s5 + $0x20] sm:$0xf]
    %v167 = vld [vmem:[%s5 + $0x24] sm:$0xf]
    %v168 = vld [vmem:[%s5 + $0x28] sm:$0xf]
    %v169 = vld [vmem:[%s5 + $0x2c] sm:$0xf]
    %v170 = vld [vmem:[%s5 + $0x30] sm:$0xf]
    %v171 = vld [vmem:[%s5 + $0x34] sm:$0xf]
    %v172 = vld [vmem:[%s5 + $0x38] sm:$0xf]
    %v173 = vld [vmem:[%s5 + $0x3c] sm:$0xf]
    %v174 = vld [vmem:[%s6] sm:$0x1]
    %v176 = vlaneseq
    %v177 = vshrl.u32 %v176, 7
    %v178 = vsub.s32 0, %v177
    %v179 = vrot.slane %v174, %v178
    %v197 = vunpack.c.l.b16 %v158
    %v198 = vunpack.c.l.b16 %v159
    %v199 = vunpack.c.l.b16 %v160
    %v200 = vunpack.c.l.b16 %v161
    %v201 = vunpack.c.l.b16 %v162
    %v202 = vunpack.c.l.b16 %v163
    %v203 = vunpack.c.l.b16 %v164
    %v204 = vunpack.c.l.b16 %v165
    %v205 = vunpack.c.l.b16 %v166
    %v206 = vunpack.c.l.b16 %v167
    %v207 = vunpack.c.l.b16 %v168
    %v208 = vunpack.c.l.b16 %v169
    %v209 = vunpack.c.l.b16 %v170
    %v210 = vunpack.c.l.b16 %v171
    %v211 = vunpack.c.l.b16 %v172
    %v212 = vunpack.c.l.b16 %v173
    %v213 = vpack.c.b16 %v198, %v197
    %v214 = vpack.c.b16 %v200, %v199
    %v215 = vpack.c.b16 %v202, %v201
    %v216 = vpack.c.b16 %v204, %v203
    %v217 = vpack.c.b16 %v206, %v205
    %v218 = vpack.c.b16 %v208, %v207
    %v219 = vpack.c.b16 %v210, %v209
    %v220 = vpack.c.b16 %v212, %v211
    %229 = vmatprep.subr.bf16.mxu0 0
    %230 = vmatpush1.bf16.msra.mxu0 %v213
    %231 = vmatprep.subr.bf16.mxu0 0
    %232 = vmatpush1.bf16.msra.mxu0 %v214
    %233 = vmatprep.subr.bf16.mxu0 0
    %234 = vmatpush1.bf16.msra.mxu0 %v215
    %235 = vmatprep.subr.bf16.mxu0 0
    %236 = vmatpush1.bf16.msra.mxu0 %v216
    %237 = vmatprep.subr.bf16.mxu0 0
    %238 = vmatpush1.bf16.msra.mxu0 %v217
    %239 = vmatprep.subr.bf16.mxu0 0
    %240 = vmatpush1.bf16.msra.mxu0 %v218
    %241 = vmatprep.subr.bf16.mxu0 0
    %242 = vmatpush1.bf16.msra.mxu0 %v219
    %243 = vmatprep.subr.bf16.mxu0 0
    %244 = vmatpush1.bf16.msra.mxu0 %v220
    %245 = vmatprep.subr.bf16.mxu0 0
    %246 = vmatpush1.bf16.msra.mxu0 0
    %247 = vmatprep.subr.bf16.mxu0 0
    %248 = vmatpush1.bf16.msra.mxu0 0
    %249 = vmatprep.subr.bf16.mxu0 0
    %250 = vmatpush1.bf16.msra.mxu0 0
    %251 = vmatprep.subr.bf16.mxu0 0
    %252 = vmatpush1.bf16.msra.mxu0 0
    %253 = vmatprep.subr.bf16.mxu0 0
    %254 = vmatpush1.bf16.msra.mxu0 0
    %255 = vmatprep.subr.bf16.mxu0 0
    %256 = vmatpush1.bf16.msra.mxu0 0
    %257 = vmatprep.subr.bf16.mxu0 0
    %258 = vmatpush1.bf16.msra.mxu0 0
    %259 = vmatprep.subr.bf16.mxu0 0
    %260 = vmatpush1.bf16.msra.mxu0 0
    %261 = vmatprep.mubr.bf16.mxu0 0
    %262 = vmatmul.mubr.bf16.gmra.mrb[0].mxu0 %v157
    %v263 = vpop.f32.mrb[0].mxu0
    %v264 = vadd.f32 %v179, %v263
    %v265 = vpop.f32.mrb[0].mxu0
    %v266 = vpop.f32.mrb[0].mxu0
    %v267 = vpop.f32.mrb[0].mxu0
    %268 = vdwg.mxu0
    %v269 = vmax.f32 %v264, 0.0
    %v270 = vpack.c.bf16 %v269, %v269
    %v271 = vld [vmem:[%s7] sm:$0xf]
    %v272 = vld [vmem:[%s7 + $0x4] sm:$0xf]
    %v273 = vld [vmem:[%s7 + $0x8] sm:$0xf]
    %v274 = vld [vmem:[%s7 + $0xc] sm:$0xf]
    %v275 = vld [vmem:[%s7 + $0x10] sm:$0xf]
    %v276 = vld [vmem:[%s7 + $0x14] sm:$0xf]
    %v277 = vld [vmem:[%s7 + $0x18] sm:$0xf]
    %v278 = vld [vmem:[%s7 + $0x1c] sm:$0xf]
    %v279 = vld [vmem:[%s7 + $0x20] sm:$0xf]
    %v280 = vld [vmem:[%s7 + $0x24] sm:$0xf]
    %v281 = vld [vmem:[%s7 + $0x28] sm:$0xf]
    %v282 = vld [vmem:[%s7 + $0x2c] sm:$0xf]
    %v283 = vld [vmem:[%s7 + $0x30] sm:$0xf]
    %v284 = vld [vmem:[%s7 + $0x34] sm:$0xf]
    %v285 = vld [vmem:[%s7 + $0x38] sm:$0xf]
    %v286 = vld [vmem:[%s7 + $0x3c] sm:$0xf]
    %v287 = vld [vmem:[%s8] sm:$0x1]
    %v289 = vlaneseq
    %v290 = vshrl.u32 %v289, 7
    %v291 = vsub.s32 0, %v290
    %v292 = vrot.slane %v287, %v291
    %v310 = vunpack.c.l.b16 %v271
    %v311 = vunpack.c.l.b16 %v272
    %v312 = vunpack.c.l.b16 %v273
    %v313 = vunpack.c.l.b16 %v274
    %v314 = vunpack.c.l.b16 %v275
    %v315 = vunpack.c.l.b16 %v276
    %v316 = vunpack.c.l.b16 %v277
    %v317 = vunpack.c.l.b16 %v278
    %v318 = vunpack.c.l.b16 %v279
    %v319 = vunpack.c.l.b16 %v280
    %v320 = vunpack.c.l.b16 %v281
    %v321 = vunpack.c.l.b16 %v282
    %v322 = vunpack.c.l.b16 %v283
    %v323 = vunpack.c.l.b16 %v284
    %v324 = vunpack.c.l.b16 %v285
    %v325 = vunpack.c.l.b16 %v286
    %v326 = vpack.c.b16 %v311, %v310
    %v327 = vpack.c.b16 %v313, %v312
    %v328 = vpack.c.b16 %v315, %v314
    %v329 = vpack.c.b16 %v317, %v316
    %v330 = vpack.c.b16 %v319, %v318
    %v331 = vpack.c.b16 %v321, %v320
    %v332 = vpack.c.b16 %v323, %v322
    %v333 = vpack.c.b16 %v325, %v324
    %342 = vmatprep.subr.bf16.mxu0 0
    %343 = vmatpush1.bf16.msra.mxu0 %v326
    %344 = vmatprep.subr.bf16.mxu0 0
    %345 = vmatpush1.bf16.msra.mxu0 %v327
    %346 = vmatprep.subr.bf16.mxu0 0
    %347 = vmatpush1.bf16.msra.mxu0 %v328
    %348 = vmatprep.subr.bf16.mxu0 0
    %349 = vmatpush1.bf16.msra.mxu0 %v329
    %350 = vmatprep.subr.bf16.mxu0 0
    %351 = vmatpush1.bf16.msra.mxu0 %v330
    %352 = vmatprep.subr.bf16.mxu0 0
    %353 = vmatpush1.bf16.msra.mxu0 %v331
    %354 = vmatprep.subr.bf16.mxu0 0
    %355 = vmatpush1.bf16.msra.mxu0 %v332
    %356 = vmatprep.subr.bf16.mxu0 0
    %357 = vmatpush1.bf16.msra.mxu0 %v333
    %358 = vmatprep.subr.bf16.mxu0 0
    %359 = vmatpush1.bf16.msra.mxu0 0
    %360 = vmatprep.subr.bf16.mxu0 0
    %361 = vmatpush1.bf16.msra.mxu0 0
    %362 = vmatprep.subr.bf16.mxu0 0
    %363 = vmatpush1.bf16.msra.mxu0 0
    %364 = vmatprep.subr.bf16.mxu0 0
    %365 = vmatpush1.bf16.msra.mxu0 0
    %366 = vmatprep.subr.bf16.mxu0 0
    %367 = vmatpush1.bf16.msra.mxu0 0
    %368 = vmatprep.subr.bf16.mxu0 0
    %369 = vmatpush1.bf16.msra.mxu0 0
    %370 = vmatprep.subr.bf16.mxu0 0
    %371 = vmatpush1.bf16.msra.mxu0 0
    %372 = vmatprep.subr.bf16.mxu0 0
    %373 = vmatpush1.bf16.msra.mxu0 0
    %374 = vmatprep.mubr.bf16.mxu0 0
    %375 = vmatmul.mubr.bf16.gmra.mrb[0].mxu0 %v270
    %v376 = vpop.f32.mrb[0].mxu0
    %v377 = vadd.f32 %v292, %v376
    %v378 = vpop.f32.mrb[0].mxu0
    %v379 = vpop.f32.mrb[0].mxu0
    %v380 = vpop.f32.mrb[0].mxu0
    %381 = vdwg.mxu0
    %382 = vst.msk [vmem:[#allocation2] sm:$0xff] %vm104, %v377
    %v383 = vld [vmem:[%s9] sm:$0xf]
    %v384 = vld [vmem:[%s9 + $0x4] sm:$0xf]
    %v385 = vld [vmem:[%s9 + $0x8] sm:$0xf]
    %v386 = vld [vmem:[%s9 + $0xc] sm:$0xf]
    %v387 = vld [vmem:[%s9 + $0x10] sm:$0xf]
    %v388 = vld [vmem:[%s9 + $0x14] sm:$0xf]
    %v389 = vld [vmem:[%s9 + $0x18] sm:$0xf]
    %v390 = vld [vmem:[%s9 + $0x1c] sm:$0xf]
    %v391 = vld [vmem:[%s9 + $0x20] sm:$0xf]
    %v392 = vld [vmem:[%s9 + $0x24] sm:$0xf]
    %v393 = vld [vmem:[%s9 + $0x28] sm:$0xf]
    %v394 = vld [vmem:[%s9 + $0x2c] sm:$0xf]
    %v395 = vld [vmem:[%s9 + $0x30] sm:$0xf]
    %v396 = vld [vmem:[%s9 + $0x34] sm:$0xf]
    %v397 = vld [vmem:[%s9 + $0x38] sm:$0xf]
    %v398 = vld [vmem:[%s9 + $0x3c] sm:$0xf]
    %v399 = vld [vmem:[%s10] sm:$0x1]
    %v401 = vlaneseq
    %v402 = vshrl.u32 %v401, 7
    %v403 = vsub.s32 0, %v402
    %v404 = vrot.slane %v399, %v403
    %v422 = vunpack.c.l.b16 %v383
    %v423 = vunpack.c.l.b16 %v384
    %v424 = vunpack.c.l.b16 %v385
    %v425 = vunpack.c.l.b16 %v386
    %v426 = vunpack.c.l.b16 %v387
    %v427 = vunpack.c.l.b16 %v388
    %v428 = vunpack.c.l.b16 %v389
    %v429 = vunpack.c.l.b16 %v390
    %v430 = vunpack.c.l.b16 %v391
    %v431 = vunpack.c.l.b16 %v392
    %v432 = vunpack.c.l.b16 %v393
    %v433 = vunpack.c.l.b16 %v394
    %v434 = vunpack.c.l.b16 %v395
    %v435 = vunpack.c.l.b16 %v396
    %v436 = vunpack.c.l.b16 %v397
    %v437 = vunpack.c.l.b16 %v398
    %v438 = vpack.c.b16 %v423, %v422
    %v439 = vpack.c.b16 %v425, %v424
    %v440 = vpack.c.b16 %v427, %v426
    %v441 = vpack.c.b16 %v429, %v428
    %v442 = vpack.c.b16 %v431, %v430
    %v443 = vpack.c.b16 %v433, %v432
    %v444 = vpack.c.b16 %v435, %v434
    %v445 = vpack.c.b16 %v437, %v436
    %454 = vmatprep.subr.bf16.mxu0 0
    %455 = vmatpush1.bf16.msra.mxu0 %v438
    %456 = vmatprep.subr.bf16.mxu0 0
    %457 = vmatpush1.bf16.msra.mxu0 %v439
    %458 = vmatprep.subr.bf16.mxu0 0
    %459 = vmatpush1.bf16.msra.mxu0 %v440
    %460 = vmatprep.subr.bf16.mxu0 0
    %461 = vmatpush1.bf16.msra.mxu0 %v441
    %462 = vmatprep.subr.bf16.mxu0 0
    %463 = vmatpush1.bf16.msra.mxu0 %v442
    %464 = vmatprep.subr.bf16.mxu0 0
    %465 = vmatpush1.bf16.msra.mxu0 %v443
    %466 = vmatprep.subr.bf16.mxu0 0
    %467 = vmatpush1.bf16.msra.mxu0 %v444
    %468 = vmatprep.subr.bf16.mxu0 0
    %469 = vmatpush1.bf16.msra.mxu0 %v445
    %470 = vmatprep.subr.bf16.mxu0 0
    %471 = vmatpush1.bf16.msra.mxu0 0
    %472 = vmatprep.subr.bf16.mxu0 0
    %473 = vmatpush1.bf16.msra.mxu0 0
    %474 = vmatprep.subr.bf16.mxu0 0
    %475 = vmatpush1.bf16.msra.mxu0 0
    %476 = vmatprep.subr.bf16.mxu0 0
    %477 = vmatpush1.bf16.msra.mxu0 0
    %478 = vmatprep.subr.bf16.mxu0 0
    %479 = vmatpush1.bf16.msra.mxu0 0
    %480 = vmatprep.subr.bf16.mxu0 0
    %481 = vmatpush1.bf16.msra.mxu0 0
    %482 = vmatprep.subr.bf16.mxu0 0
    %483 = vmatpush1.bf16.msra.mxu0 0
    %484 = vmatprep.subr.bf16.mxu0 0
    %485 = vmatpush1.bf16.msra.mxu0 0
    %486 = vmatprep.mubr.bf16.mxu0 0
    %487 = vmatmul.mubr.bf16.gmra.mrb[0].mxu0 %v270
    %v488 = vpop.f32.mrb[0].mxu0
    %v489 = vadd.f32 %v404, %v488
    %v490 = vpop.f32.mrb[0].mxu0
    %v491 = vpop.f32.mrb[0].mxu0
    %v492 = vpop.f32.mrb[0].mxu0
    %493 = vdwg.mxu0
    %v494 = vsel %vm50, %v489, -inf
    %495 = vmax.xlane.f32.xlu0 %v494
    %v496 = vpop.xlane.xlu0 %495
    %v497 = vsub.f32 %v489, %v496
    %v498 = vmul.f32 %v497, 1.442695
    %v499 = vpow.pop %v498
    %v500 = vsel %vm50, %v499, 0.0
    %501 = vadd.xlane.f32.xlu0 %v500
    %v502 = vpop.xlane.xlu0 %501
    %v503 = vrcp.pop %v502
    %v504 = vmul.f32 %v499, %v503
    %505 = vst.msk [vmem:[#allocation4] sm:$0xff] %vm50, %v504
    // Predicated region
    $region46: #{tpu_custom_call.1} parent=1 // pred_check
      _
    $region47: #{tpu_custom_call.1} parent=1 // pred_check_branch
      %507 = sbr.rel (0) target = $region49
    $region48: #{tpu_custom_call.1} parent=1 // pred_region
      %s509 = ssub.s32 128, 128
      %510 = vsyncadd [#allocation3], %s509
      %s512 = sshll.u32 [#allocation2], 4
      %s513 = int_to_ptr.vmem [resolvable:$true] %s512
      %515 = dma.vmem_to_hbm [thread:$0]  %s513, 128, %s11, [#allocation3]
    $region49: #{tpu_custom_call.1} parent=1 // pred_fallthru
      _
    // Predicated region
    $region50: #{tpu_custom_call.1} parent=1 // pred_check
      _
    $region51: #{tpu_custom_call.1} parent=1 // pred_check_branch
      %517 = sbr.rel (0) target = $region53
    $region52: #{tpu_custom_call.1} parent=1 // pred_region
      %s519 = ssub.s32 128, 128
      %520 = vsyncadd [#allocation5], %s519
      %s522 = sshll.u32 [#allocation4], 4
      %s523 = int_to_ptr.vmem [resolvable:$true] %s522
      %525 = dma.vmem_to_hbm [thread:$0]  %s523, 128, %s12, [#allocation5]
    $region53: #{tpu_custom_call.1} parent=1 // pred_fallthru
      _
    // Predicated region
    $region54: #{tpu_custom_call.1} parent=1 // pred_check
      _
    $region55: #{tpu_custom_call.1} parent=1 // pred_check_branch
      %527 = sbr.rel (0) target = $region57
    $region56: #{tpu_custom_call.1} parent=1 // pred_region
      %528 = dma.done [#allocation3], 128
    $region57: #{tpu_custom_call.1} parent=1 // pred_fallthru
      _
    // Predicated region
    $region58: #{tpu_custom_call.1} parent=1 // pred_check
      _
    $region59: #{tpu_custom_call.1} parent=1 // pred_check_branch
      %530 = sbr.rel (0) target = $region61
    $region60: #{tpu_custom_call.1} parent=1 // pred_region
      %531 = dma.done [#allocation5], 128
    $region61: #{tpu_custom_call.1} parent=1 // pred_fallthru
      _
    %532 = vsyncpa [#allocation3], 1
    %533 = vsyncpa [#allocation5], 1

</llo_original>
